<compile_context>
chip_gen: v7x
topology: tpu7x:2x2x1
jax: 0.10.0
libtpu: 0.0.40
codegen_flags: <defaults>
</compile_context>

<pallas_src>
import math

import jax
import jax.numpy as jnp
from jax.experimental import pallas as pl
from jax.experimental.pallas import tpu as pltpu


_MAX_DMA_CHUNKS = 8  # a handful of large concurrent DMAs saturates HBM


def _round_up(n: int, m: int) -> int:
    return ((n + m - 1) // m) * m


def _flatten_copy_pallas(x2: jax.Array) -> jax.Array:
    """Identity copy of a 2-D array, done as chunked HBM->HBM DMAs."""
    rows, cols = x2.shape

    # Static, 8-row-aligned chunking of the leading dim (at most
    # _MAX_DMA_CHUNKS chunks).  All starts/sizes are Python ints, so the
    # copies are fully unrolled at trace time.
    chunk = _round_up(max(1, pl.cdiv(rows, _MAX_DMA_CHUNKS)), 8)
    starts = list(range(0, rows, chunk))
    sizes = [min(chunk, rows - s) for s in starts]
    nchunks = len(starts)

    def kernel(x_hbm, o_hbm, sem):
        copies = [
            pltpu.make_async_copy(
                x_hbm.at[pl.ds(s, z)],
                o_hbm.at[pl.ds(s, z)],
                sem.at[i],
            )
            for i, (s, z) in enumerate(zip(starts, sizes))
        ]
        for cp in copies:  # issue all DMAs back-to-back ...
            cp.start()
        for cp in copies:  # ... then wait for completion
            cp.wait()

    return pl.pallas_call(
        kernel,
        out_shape=jax.ShapeDtypeStruct((rows, cols), x2.dtype),
        in_specs=[pl.BlockSpec(memory_space=pl.ANY)],
        out_specs=pl.BlockSpec(memory_space=pl.ANY),
        scratch_shapes=[pltpu.SemaphoreType.DMA((nchunks,))],
    )(x2)


def flatten(x: jax.Array, *, force_pallas_copy: bool = False) -> jax.Array:
    """Pallas equivalent of torch Flatten: (B, ...) -> (B, prod(...))."""
    b = x.shape[0]
    flat = int(math.prod(x.shape[1:]))  # prod(()) == 1 handles 1-D inputs

    if not force_pallas_copy:
        # Review #1: flatten of a contiguous tensor is a metadata-only
        # reshape -- zero HBM traffic, unbounded win over any copy kernel.
        return x.reshape(b, flat)

    # Free metadata reshape so the DMA copy sees the final 2-D shape, then
    # a physical HBM->HBM copy through the Pallas kernel (review #2).
    return _flatten_copy_pallas(x.reshape(b, flat))


if __name__ == "__main__":
    key = jax.random.PRNGKey(0)
    # Small NCHW input consistent with protonets conv feature maps.
    x = jax.random.normal(key, (2, 4, 16, 16), dtype=jnp.float32)

    # Default (recommended) path: zero-cost metadata reshape.
    y_fast = flatten(x)

    # Pallas path: explicit HBM->HBM DMA copy kernel.
    y_kernel = flatten(x, force_pallas_copy=True)
    y_kernel = jax.block_until_ready(y_kernel)

    # Correctness check against plain JAX reshape (== torch .view semantics).
    y_ref = x.reshape(x.shape[0], -1)
    assert y_kernel.shape == (2, 4 * 16 * 16), y_kernel.shape
    assert y_kernel.dtype == x.dtype
    assert jnp.array_equal(y_kernel, y_ref)
    assert jnp.array_equal(y_fast, y_ref)

    print("KERNEL_OK")
</pallas_src>

<mosaic_0001>
module attributes {stable_mosaic.version = 11 : i64} {
  func.func @kernel(%arg0: memref<2x1024xf32, #tpu.memory_space<any>>, %arg1: memref<2x1024xf32, #tpu.memory_space<any>>, %arg2: memref<1x!tpu.dma_semaphore, #tpu.memory_space<semaphore_mem>>) attributes {dimension_semantics = [], scalar_prefetch = 0 : i64, scratch_operands = 1 : i64, tpu.core_type = #tpu.core_type<tc>} {
    %c0_i32 = arith.constant 0 : i32
    %c0_i32_0 = arith.constant 0 : i32
    %c0_i32_1 = arith.constant 0 : i32
    %0 = tpu.memref_slice %arg0[%c0_i32_0, %c0_i32_1] : memref<2x1024xf32, #tpu.memory_space<any>> -> memref<2x1024xf32, #tpu.memory_space<any>>
    %c0_i32_2 = arith.constant 0 : i32
    %c0_i32_3 = arith.constant 0 : i32
    %1 = tpu.memref_slice %arg1[%c0_i32_2, %c0_i32_3] : memref<2x1024xf32, #tpu.memory_space<any>> -> memref<2x1024xf32, #tpu.memory_space<any>>
    %2 = tpu.memref_slice %arg2[%c0_i32] : memref<1x!tpu.dma_semaphore, #tpu.memory_space<semaphore_mem>> -> memref<1x!tpu.dma_semaphore, #tpu.memory_space<semaphore_mem>>
    %3 = tpu.memref_squeeze %2 : memref<1x!tpu.dma_semaphore, #tpu.memory_space<semaphore_mem>> -> memref<!tpu.dma_semaphore, #tpu.memory_space<semaphore_mem>>
    tpu.enqueue_dma source(%0 : memref<2x1024xf32, #tpu.memory_space<any>>) target(%1 : memref<2x1024xf32, #tpu.memory_space<any>>) target_semaphore(%3 : memref<!tpu.dma_semaphore, #tpu.memory_space<semaphore_mem>>)
    %c0_i32_4 = arith.constant 0 : i32
    %c0_i32_5 = arith.constant 0 : i32
    %c0_i32_6 = arith.constant 0 : i32
    %4 = tpu.memref_slice %arg0[%c0_i32_5, %c0_i32_6] : memref<2x1024xf32, #tpu.memory_space<any>> -> memref<2x1024xf32, #tpu.memory_space<any>>
    %c0_i32_7 = arith.constant 0 : i32
    %c0_i32_8 = arith.constant 0 : i32
    %5 = tpu.memref_slice %arg1[%c0_i32_7, %c0_i32_8] : memref<2x1024xf32, #tpu.memory_space<any>> -> memref<2x1024xf32, #tpu.memory_space<any>>
    %6 = tpu.memref_slice %arg2[%c0_i32_4] : memref<1x!tpu.dma_semaphore, #tpu.memory_space<semaphore_mem>> -> memref<1x!tpu.dma_semaphore, #tpu.memory_space<semaphore_mem>>
    %7 = tpu.memref_squeeze %6 : memref<1x!tpu.dma_semaphore, #tpu.memory_space<semaphore_mem>> -> memref<!tpu.dma_semaphore, #tpu.memory_space<semaphore_mem>>
    tpu.wait_dma2 semaphore(%7 : memref<!tpu.dma_semaphore, #tpu.memory_space<semaphore_mem>>) src(%4 : memref<2x1024xf32, #tpu.memory_space<any>>) dst(%5 : memref<2x1024xf32, #tpu.memory_space<any>>)
    return
  }
}

</mosaic_0001>

<llo_original>
// kernel: tpu_custom_call.1
$region0: #{tpu_custom_call.1}
  #allocation0 [shape = 'u32[]', space=smem, size = 0x4, offset = 0x4, fixed_abs, tag = 'smem constant byte address 0x4 - core index']
  #allocation1 [shape = 'u32[144,128]{1,0:T(1,128)}', space=vmem, size = 0x12000, scoped, tag = 'internal scratch']
  #allocation2 [shape = 's32[1]{0}', space=sflag, size = 0x4, scoped, tag = 'scratch operand']
  #allocation3 [shape = 's32[]', space=sflag, size = 0x4, offset = 0, fixed_abs, tag = 'sflag constant byte address 0x0 - dummy sync flag']
  #allocation4 [shape = 'u32[0]{0}', space=smem, size = 0, offset = 0, fixed_abs, tag = 'smem constant byte address 0x0 - null']
  %s0 = inlined_call_operand.hbm [shape: f32[2,1024], index: 0, kind: input, shape index: {}]
  %s1 = inlined_call_operand.hbm [shape: f32[2,1024], index: 1, kind: output, shape index: {}]
  %s2 = sld [smem:[#allocation0]]
  $region2: #{tpu_custom_call.1} parent=0
    _
  %s4 = ssub.s32 1, %s2
  %s5 = scalar_select 0, %s4, %s2
  %s7 = sshll.u32 1, 14
  %s8 = sxor.u32 4294967295, %s7
  %s11 = sshll.u32 3, 24
  %s12 = sxor.u32 4294967295, %s11
  %s13 = sand.u32 0, %s12
  %s15 = sor.u32 %s13, 0
  %18 = dma.general %s0, 256, %s1, [#allocation2], [#allocation3], [#allocation4], %s15, 0
  %s19 = smul.u32 2, 1
  %s20 = smul.u32 %s19, 8
  %s21 = sshll.u32 %s20, 4
  %22 = dma.done [#allocation2], %s21
  %23 = vsyncmov [#allocation2]
  %s24 = vpop.sfrf %23
  %p25 = scmp.eq.s32.totalorder %s24, 0
  %p26 = pneg %p25
  %28 = shalt.err (%p26)

</llo_original>
